<compile_context>
chip_gen: v7x
topology: tpu7x:2x2x1
jax: 0.10.0
libtpu: 0.0.40
codegen_flags: <defaults>
</compile_context>

<pallas_src>
import functools

import numpy as np
import jax
import jax.numpy as jnp
from jax.experimental import pallas as pl
from jax.experimental.pallas import tpu as pltpu


_LANES = 128
_VMEM_LIMIT_BYTES = 32 * 1024 * 1024   # explicit scoped-VMEM request (safe on v5e/v6e/v7x)
_VMEM_BUDGET = 12 << 20                # our own double-buffered footprint target


def _round_up(x, m):
    return ((x + m - 1) // m) * m


def _round_down(x, m):
    return max(m, (x // m) * m)


def _num_tensorcores():
    """Best-effort TensorCores-per-chip (v7x has 2); defaults to 1."""
    try:
        kind = (getattr(jax.devices()[0], "device_kind", "") or "").lower()
        if "v7" in kind:
            return 2
    except Exception:
        pass
    return 1


def _pick_row_count(n_rows, per_row_bytes, total_bytes, sub, n_tc):
    """Rows per block: a multiple of `sub` (or the full dim), VMEM- and step-aware.

    per_row_bytes: lane-padded VMEM bytes per row across all blocks (in + out + aux),
    single-buffered; doubled below for the pipeline's double buffering.
    """
    if n_rows <= sub:
        return n_rows
    max_rows = max(sub, _round_down(_VMEM_BUDGET // (2 * per_row_bytes), sub))
    steps = 1
    if total_bytes > (256 << 10):                       # amortize ~0.35us/step overhead
        steps = max(2, pl.cdiv(total_bytes, 2 << 20))   # ~2 MiB data blocks
    if n_tc >= 2 and total_bytes > (64 << 10):          # keep both v7x TCs busy
        steps = max(steps, 2 * n_tc)
    tr = min(_round_up(pl.cdiv(n_rows, steps), sub), max_rows)
    if tr >= n_rows:
        return n_rows
    return max(sub, _round_down(tr, sub))


# ----------------------------------------------------------------------------
# Flat lane-dense path: data viewed as (F, 128); per-row scale rebuilt in-kernel.
# ----------------------------------------------------------------------------
def _flat_scale_mul_kernel(ssel_ref, start_ref, x_ref, o_ref, *, n_sel):
    x = x_ref[...]                                              # (tr, 128) lane-dense
    lane = jax.lax.broadcasted_iota(jnp.int32, x.shape, 1)
    # Channel 0 of every row starts at (or before) lane 0.
    s = jnp.broadcast_to(ssel_ref[:, 0:1], x.shape)
    for j in range(1, n_sel):                                   # unrolled; n_sel <= 8
        cand = jnp.broadcast_to(ssel_ref[:, j:j + 1], x.shape)
        s = jnp.where(lane >= start_ref[:, j:j + 1], cand, s)
    o_ref[...] = x * s


def _flat_path(x666, x661, R, HW, itemsize, n_sel, n_tc):
    L = _LANES
    F = (R * HW) // L
    dtype = x661.dtype
    x2d = x661.reshape(F, L)                    # contiguous (free) reshape
    s_per_chan = x666.reshape(R)

    # Static per-row tables (depend only on shapes): which channels a 128-lane
    # row can touch, and the lane where each of them starts within the row.
    r = np.arange(F, dtype=np.int64)
    c0 = (r * L) // HW
    j = np.arange(n_sel, dtype=np.int64)
    chan = c0[:, None] + j[None, :]                             # (F, n_sel)
    start = chan * HW - (r * L)[:, None]                        # lane where channel begins
    start = np.where(chan < R, start, L)                        # nonexistent channels: never win
    start = np.clip(start, -1, L).astype(np.int32)              # clip preserves select semantics
    chan = np.minimum(chan, R - 1).astype(np.int32)

    s_sel = jnp.take(s_per_chan, jnp.asarray(chan), axis=0)     # (F, n_sel), tiny XLA gather
    starts = jnp.asarray(start, dtype=jnp.int32)                # (F, n_sel)

    sub = max(8, 32 // itemsize)
    # Lane-padded VMEM bytes per row: x + o (128 lanes each) + ssel + starts (padded to 128).
    per_row = 2 * L * itemsize + L * itemsize + L * 4
    tr = _pick_row_count(F, per_row, F * L * itemsize, sub, n_tc)
    grid = (pl.cdiv(F, tr),)

    out = pl.pallas_call(
        functools.partial(_flat_scale_mul_kernel, n_sel=n_sel),
        out_shape=jax.ShapeDtypeStruct((F, L), dtype),
        grid_spec=pltpu.PrefetchScalarGridSpec(
            num_scalar_prefetch=0,
            grid=grid,
            in_specs=[
                pl.BlockSpec((tr, n_sel), lambda i: (i, 0)),    # per-row scale candidates
                pl.BlockSpec((tr, n_sel), lambda i: (i, 0)),    # per-row lane boundaries
                pl.BlockSpec((tr, L), lambda i: (i, 0)),        # lane-dense data rows
            ],
            out_specs=pl.BlockSpec((tr, L), lambda i: (i, 0)),
        ),
        compiler_params=pltpu.CompilerParams(
            dimension_semantics=("parallel",),
            vmem_limit_bytes=_VMEM_LIMIT_BYTES,
        ),
    )(s_sel, starts, x2d)
    return out


# ----------------------------------------------------------------------------
# Fallback row path: rows = (batch, channel), lanes = spatial.
# ----------------------------------------------------------------------------
def _row_scale_mul_kernel(s_ref, x_ref, o_ref):
    o_ref[...] = x_ref[...] * s_ref[...]        # (tr,1) scale lane-broadcast


def _row_path(x666, x661, R, HW, itemsize, n_tc):
    dtype = x661.dtype
    x2d = x661.reshape(R, HW)                   # contiguous (free) reshape
    s2d = x666.reshape(R, 1)

    sub = max(8, 32 // itemsize)
    hw_pad = _round_up(HW, _LANES)
    # Lane tiling only when even a `sub`-row block of the full row would blow VMEM.
    if 4 * hw_pad * itemsize * sub > _VMEM_BUDGET:
        tl = max(_LANES, _round_down((2 << 20) // itemsize, _LANES))
        tl = min(tl, HW)
    else:
        tl = HW
    tl_pad = _round_up(min(tl, HW), _LANES)
    per_row = (2 * tl_pad + _LANES) * itemsize  # x + o (+ padded (tr,1) scale)
    tr = _pick_row_count(R, per_row, R * min(tl, HW) * itemsize, sub, n_tc)
    grid = (pl.cdiv(R, tr), pl.cdiv(HW, tl))

    out = pl.pallas_call(
        _row_scale_mul_kernel,
        out_shape=jax.ShapeDtypeStruct((R, HW), dtype),
        grid_spec=pltpu.PrefetchScalarGridSpec(
            num_scalar_prefetch=0,
            grid=grid,
            in_specs=[
                pl.BlockSpec((tr, 1), lambda i, j: (i, 0)),     # per-row scale (fetched per i)
                pl.BlockSpec((tr, tl), lambda i, j: (i, j)),    # feature tile
            ],
            out_specs=pl.BlockSpec((tr, tl), lambda i, j: (i, j)),
        ),
        compiler_params=pltpu.CompilerParams(
            dimension_semantics=("parallel", "parallel"),
            vmem_limit_bytes=_VMEM_LIMIT_BYTES,
        ),
    )(s2d, x2d)
    return out


def scale_mul(x666, x661):
    """Compute x666 * x661 with x666: (N, C, 1, 1), x661: (N, C, H, W)."""
    N, C, H, W = x661.shape
    assert x666.shape == (N, C, 1, 1)
    assert x666.dtype == x661.dtype

    R, HW = N * C, H * W
    itemsize = jnp.dtype(x661.dtype).itemsize
    n_tc = _num_tensorcores()

    use_flat = (HW % _LANES != 0) and ((R * HW) % _LANES == 0)
    n_sel = (_LANES - 1) // HW + 2 if HW > 0 else _LANES + 1
    use_flat = use_flat and n_sel <= 8          # keep the in-kernel select chain cheap

    if use_flat:
        out2d = _flat_path(x666, x661, R, HW, itemsize, n_sel, n_tc)
    else:
        out2d = _row_path(x666, x661, R, HW, itemsize, n_tc)
    return out2d.reshape(N, C, H, W)


if __name__ == "__main__":
    key = jax.random.PRNGKey(0)

    def run_case(n, c, h, w, dtype=jnp.float32):
        k1, k2 = jax.random.split(jax.random.fold_in(key, n * 100000 + c * 100 + h))
        x661 = jax.random.normal(k1, (n, c, h, w), dtype=dtype)
        x666 = jax.random.normal(k2, (n, c, 1, 1), dtype=dtype)
        out = jax.block_until_ready(scale_mul(x666, x661))
        ref = x666 * x661
        assert out.shape == ref.shape and out.dtype == ref.dtype
        assert jnp.allclose(out, ref, atol=1e-6, rtol=1e-6), (n, c, h, w)

    # Small shapes consistent with the module's (N, C, 1, 1) * (N, C, H, W) forward.
    run_case(2, 192, 7, 7)   # lane-dense flat path (HW=49, N*C*H*W % 128 == 0), like the spec
    run_case(2, 8, 5, 5)     # fallback per-channel-row path (N*C*H*W % 128 != 0)
    run_case(1, 16, 16, 8)   # HW = 128 -> row path, already lane-dense

    print("KERNEL_OK")
</pallas_src>

<mosaic_0001>
module attributes {stable_mosaic.version = 11 : i64} {
  func.func @_flat_scale_mul_kernel(%arg0: i32, %arg1: memref<147x4xf32, #tpu.memory_space<vmem>>, %arg2: memref<147x4xi32, #tpu.memory_space<vmem>>, %arg3: memref<147x128xf32, #tpu.memory_space<vmem>>, %arg4: memref<147x128xf32, #tpu.memory_space<vmem>>) attributes {dimension_semantics = [#tpu.dimension_semantics<parallel>], iteration_bounds = array<i64: 1>, scalar_prefetch = 0 : i64, scratch_operands = 0 : i64, tpu.core_type = #tpu.core_type<tc>, window_params = [{transform_indices = @transform_0, window_bounds = array<i64: 147, 4>}, {transform_indices = @transform_1, window_bounds = array<i64: 147, 4>}, {transform_indices = @transform_2, window_bounds = array<i64: 147, 128>}, {transform_indices = @transform_3, window_bounds = array<i64: 147, 128>}]} {
    %c0 = arith.constant 0 : index
    %c0_0 = arith.constant 0 : index
    %0 = vector.load %arg3[%c0, %c0_0] : memref<147x128xf32, #tpu.memory_space<vmem>>, vector<147x128xf32>
    %1 = tpu.iota {dimensions = array<i32: 1>} : vector<147x128xi32>
    %c0_1 = arith.constant 0 : index
    %c0_2 = arith.constant 0 : index
    %2 = vector.load %arg1[%c0_1, %c0_2] : memref<147x4xf32, #tpu.memory_space<vmem>>, vector<147x1xf32>
    %3 = vector.shape_cast %2 : vector<147x1xf32> to vector<147x1xf32>
    %4 = vector.broadcast %3 : vector<147x1xf32> to vector<147x128xf32>
    %c0_3 = arith.constant 0 : index
    %c1 = arith.constant 1 : index
    %5 = vector.load %arg1[%c0_3, %c1] : memref<147x4xf32, #tpu.memory_space<vmem>>, vector<147x1xf32>
    %6 = vector.shape_cast %5 : vector<147x1xf32> to vector<147x1xf32>
    %7 = vector.broadcast %6 : vector<147x1xf32> to vector<147x128xf32>
    %c0_4 = arith.constant 0 : index
    %c1_5 = arith.constant 1 : index
    %8 = vector.load %arg2[%c0_4, %c1_5] : memref<147x4xi32, #tpu.memory_space<vmem>>, vector<147x1xi32>
    %9 = vector.broadcast %8 : vector<147x1xi32> to vector<147x128xi32>
    %10 = arith.cmpi sge, %1, %9 : vector<147x128xi32>
    %11 = arith.select %10, %7, %4 : vector<147x128xi1>, vector<147x128xf32>
    %c0_6 = arith.constant 0 : index
    %c2 = arith.constant 2 : index
    %12 = vector.load %arg1[%c0_6, %c2] : memref<147x4xf32, #tpu.memory_space<vmem>>, vector<147x1xf32>
    %13 = vector.shape_cast %12 : vector<147x1xf32> to vector<147x1xf32>
    %14 = vector.broadcast %13 : vector<147x1xf32> to vector<147x128xf32>
    %c0_7 = arith.constant 0 : index
    %c2_8 = arith.constant 2 : index
    %15 = vector.load %arg2[%c0_7, %c2_8] : memref<147x4xi32, #tpu.memory_space<vmem>>, vector<147x1xi32>
    %16 = vector.broadcast %15 : vector<147x1xi32> to vector<147x128xi32>
    %17 = arith.cmpi sge, %1, %16 : vector<147x128xi32>
    %18 = arith.select %17, %14, %11 : vector<147x128xi1>, vector<147x128xf32>
    %c0_9 = arith.constant 0 : index
    %c3 = arith.constant 3 : index
    %19 = vector.load %arg1[%c0_9, %c3] : memref<147x4xf32, #tpu.memory_space<vmem>>, vector<147x1xf32>
    %20 = vector.shape_cast %19 : vector<147x1xf32> to vector<147x1xf32>
    %21 = vector.broadcast %20 : vector<147x1xf32> to vector<147x128xf32>
    %c0_10 = arith.constant 0 : index
    %c3_11 = arith.constant 3 : index
    %22 = vector.load %arg2[%c0_10, %c3_11] : memref<147x4xi32, #tpu.memory_space<vmem>>, vector<147x1xi32>
    %23 = vector.broadcast %22 : vector<147x1xi32> to vector<147x128xi32>
    %24 = arith.cmpi sge, %1, %23 : vector<147x128xi32>
    %25 = arith.select %24, %21, %18 : vector<147x128xi1>, vector<147x128xf32>
    %26 = arith.mulf %0, %25 : vector<147x128xf32>
    %c0_12 = arith.constant 0 : index
    %c0_13 = arith.constant 0 : index
    %27 = vector.load %arg4[%c0_12, %c0_13] : memref<147x128xf32, #tpu.memory_space<vmem>>, vector<147x128xf32>
    tpu.vector_store %arg4[%c0_12, %c0_13], %26 {strides = array<i32>} : memref<147x128xf32, #tpu.memory_space<vmem>>, vector<147x128xf32>,
    return
  }
  func.func @transform_0(%arg0: i32) -> (i32, i32) {
    %c0_i32 = arith.constant 0 : i32
    %c0_i32_0 = arith.constant 0 : i32
    return %arg0, %c0_i32 : i32, i32
  }
  func.func @transform_1(%arg0: i32) -> (i32, i32) {
    %c0_i32 = arith.constant 0 : i32
    %c0_i32_0 = arith.constant 0 : i32
    return %arg0, %c0_i32 : i32, i32
  }
  func.func @transform_2(%arg0: i32) -> (i32, i32) {
    %c0_i32 = arith.constant 0 : i32
    %c0_i32_0 = arith.constant 0 : i32
    return %arg0, %c0_i32 : i32, i32
  }
  func.func @transform_3(%arg0: i32) -> (i32, i32) {
    %c0_i32 = arith.constant 0 : i32
    %c0_i32_0 = arith.constant 0 : i32
    return %arg0, %c0_i32 : i32, i32
  }
}

</mosaic_0001>

<llo_original>
// kernel: tpu_custom_call.1
$region0: #{tpu_custom_call.1}
  #allocation0 [shape = 'u32[]', space=smem, size = 0x4, offset = 0x4, fixed_abs, tag = 'smem constant byte address 0x4 - core index']
  #allocation1 [shape = 'u32[144,128]{1,0:T(1,128)}', space=vmem, size = 0x12000, scoped, tag = 'internal scratch']
  %s0 = inlined_call_operand.vmem [shape: f32[147,4], index: 0, kind: input, shape index: {}]
  %s1 = inlined_call_operand.vmem [shape: s32[147,4], index: 1, kind: input, shape index: {}]
  %s2 = inlined_call_operand.vmem [shape: f32[147,128], index: 2, kind: input, shape index: {}]
  %s3 = inlined_call_operand.hbm [shape: f32[147,128], index: 3, kind: output, shape index: {}]
  %s4 = sld [smem:[#allocation0]]
  $region22: #{tpu_custom_call.1} parent=0
    _
  %s6 = ssub.s32 1, %s4
  %s7 = scalar_select 0, %s6, %s4
  $region1: #{tpu_custom_call.1} parent=0
    #allocation2 [shape = 'u8[77824]{0}', space=vmem, size = 0x13000, scoped, tag = 'output window, operand 0, single buffered']
    #allocation3 [shape = 's32[1]{0}', space=sflag, size = 0x4, scoped, tag = 'scoped memory for tpu_custom_call.1']
    %8 = vsyncpa [#allocation3], 0
    // Predicated region
    $region2: #{tpu_custom_call.1} parent=1 // pred_check
      _
    $region3: #{tpu_custom_call.1} parent=1 // pred_check_branch
      %10 = sbr.rel (0) target = $region5
    $region4: #{tpu_custom_call.1} parent=1 // pred_region
      _
    $region5: #{tpu_custom_call.1} parent=1 // pred_fallthru
      _
    // Predicated region
    $region6: #{tpu_custom_call.1} parent=1 // pred_check
      _
    $region7: #{tpu_custom_call.1} parent=1 // pred_check_branch
      %12 = sbr.rel (0) target = $region9
    $region8: #{tpu_custom_call.1} parent=1 // pred_region
      _
    $region9: #{tpu_custom_call.1} parent=1 // pred_fallthru
      _
    // Predicated region
    $region10: #{tpu_custom_call.1} parent=1 // pred_check
      _
    $region11: #{tpu_custom_call.1} parent=1 // pred_check_branch
      %14 = sbr.rel (0) target = $region13
    $region12: #{tpu_custom_call.1} parent=1 // pred_region
      _
    $region13: #{tpu_custom_call.1} parent=1 // pred_fallthru
      _
    %v15 = vld [vmem:[%s2] sm:$0xff]
    %v16 = vld [vmem:[%s2 + $0x8] sm:$0xff]
    %v17 = vld [vmem:[%s2 + $0x10] sm:$0xff]
    %v18 = vld [vmem:[%s2 + $0x18] sm:$0xff]
    %v19 = vld [vmem:[%s2 + $0x20] sm:$0xff]
    %v20 = vld [vmem:[%s2 + $0x28] sm:$0xff]
    %v21 = vld [vmem:[%s2 + $0x30] sm:$0xff]
    %v22 = vld [vmem:[%s2 + $0x38] sm:$0xff]
    %v23 = vld [vmem:[%s2 + $0x40] sm:$0xff]
    %v24 = vld [vmem:[%s2 + $0x48] sm:$0xff]
    %v25 = vld [vmem:[%s2 + $0x50] sm:$0xff]
    %v26 = vld [vmem:[%s2 + $0x58] sm:$0xff]
    %v27 = vld [vmem:[%s2 + $0x60] sm:$0xff]
    %v28 = vld [vmem:[%s2 + $0x68] sm:$0xff]
    %v29 = vld [vmem:[%s2 + $0x70] sm:$0xff]
    %v30 = vld [vmem:[%s2 + $0x78] sm:$0xff]
    %v31 = vld [vmem:[%s2 + $0x80] sm:$0xff]
    %v32 = vld [vmem:[%s2 + $0x88] sm:$0xff]
    %v33 = vld [vmem:[%s2 + $0x90] sm:$0x7]
    %v34 = vlaneseq
    %v35 = vand.u32 %v34, 127
    %v36 = vld [vmem:[%s0] sm:$0xff]
    %v37 = vld [vmem:[%s0 + $0x8] sm:$0xff]
    %v38 = vld [vmem:[%s0 + $0x10] sm:$0xff]
    %v39 = vld [vmem:[%s0 + $0x18] sm:$0xff]
    %v40 = vld [vmem:[%s0 + $0x20] sm:$0xff]
    %v41 = vld [vmem:[%s0 + $0x28] sm:$0xff]
    %v42 = vld [vmem:[%s0 + $0x30] sm:$0xff]
    %v43 = vld [vmem:[%s0 + $0x38] sm:$0xff]
    %v44 = vld [vmem:[%s0 + $0x40] sm:$0xff]
    %v45 = vld [vmem:[%s0 + $0x48] sm:$0xff]
    %v46 = vld [vmem:[%s0 + $0x50] sm:$0xff]
    %v47 = vld [vmem:[%s0 + $0x58] sm:$0xff]
    %v48 = vld [vmem:[%s0 + $0x60] sm:$0xff]
    %v49 = vld [vmem:[%s0 + $0x68] sm:$0xff]
    %v50 = vld [vmem:[%s0 + $0x70] sm:$0xff]
    %v51 = vld [vmem:[%s0 + $0x78] sm:$0xff]
    %v52 = vld [vmem:[%s0 + $0x80] sm:$0xff]
    %v53 = vld [vmem:[%s0 + $0x88] sm:$0xff]
    %v54 = vld [vmem:[%s0 + $0x90] sm:$0x7]
    %56 = vset.pattern.permute.xlu0 0
    %57 = vperm.xlu0 %56, %v36
    %v58 = vpop.permute.xlu0 %57
    %61 = vset.pattern.permute.xlu0 0
    %62 = vperm.xlu0 %61, %v37
    %v63 = vpop.permute.xlu0 %62
    %66 = vset.pattern.permute.xlu0 0
    %67 = vperm.xlu0 %66, %v38
    %v68 = vpop.permute.xlu0 %67
    %71 = vset.pattern.permute.xlu0 0
    %72 = vperm.xlu0 %71, %v39
    %v73 = vpop.permute.xlu0 %72
    %76 = vset.pattern.permute.xlu0 0
    %77 = vperm.xlu0 %76, %v40
    %v78 = vpop.permute.xlu0 %77
    %81 = vset.pattern.permute.xlu0 0
    %82 = vperm.xlu0 %81, %v41
    %v83 = vpop.permute.xlu0 %82
    %86 = vset.pattern.permute.xlu0 0
    %87 = vperm.xlu0 %86, %v42
    %v88 = vpop.permute.xlu0 %87
    %91 = vset.pattern.permute.xlu0 0
    %92 = vperm.xlu0 %91, %v43
    %v93 = vpop.permute.xlu0 %92
    %96 = vset.pattern.permute.xlu0 0
    %97 = vperm.xlu0 %96, %v44
    %v98 = vpop.permute.xlu0 %97
    %101 = vset.pattern.permute.xlu0 0
    %102 = vperm.xlu0 %101, %v45
    %v103 = vpop.permute.xlu0 %102
    %106 = vset.pattern.permute.xlu0 0
    %107 = vperm.xlu0 %106, %v46
    %v108 = vpop.permute.xlu0 %107
    %111 = vset.pattern.permute.xlu0 0
    %112 = vperm.xlu0 %111, %v47
    %v113 = vpop.permute.xlu0 %112
    %116 = vset.pattern.permute.xlu0 0
    %117 = vperm.xlu0 %116, %v48
    %v118 = vpop.permute.xlu0 %117
    %121 = vset.pattern.permute.xlu0 0
    %122 = vperm.xlu0 %121, %v49
    %v123 = vpop.permute.xlu0 %122
    %126 = vset.pattern.permute.xlu0 0
    %127 = vperm.xlu0 %126, %v50
    %v128 = vpop.permute.xlu0 %127
    %131 = vset.pattern.permute.xlu0 0
    %132 = vperm.xlu0 %131, %v51
    %v133 = vpop.permute.xlu0 %132
    %136 = vset.pattern.permute.xlu0 0
    %137 = vperm.xlu0 %136, %v52
    %v138 = vpop.permute.xlu0 %137
    %141 = vset.pattern.permute.xlu0 0
    %142 = vperm.xlu0 %141, %v53
    %v143 = vpop.permute.xlu0 %142
    %146 = vset.pattern.permute.xlu0 0
    %147 = vperm.xlu0 %146, %v54
    %v148 = vpop.permute.xlu0 %147
    %150 = vset.pattern.permute.xlu0 1
    %151 = vperm.xlu0 %150, %v36
    %v152 = vpop.permute.xlu0 %151
    %154 = vset.pattern.permute.xlu0 1
    %155 = vperm.xlu0 %154, %v37
    %v156 = vpop.permute.xlu0 %155
    %158 = vset.pattern.permute.xlu0 1
    %159 = vperm.xlu0 %158, %v38
    %v160 = vpop.permute.xlu0 %159
    %162 = vset.pattern.permute.xlu0 1
    %163 = vperm.xlu0 %162, %v39
    %v164 = vpop.permute.xlu0 %163
    %166 = vset.pattern.permute.xlu0 1
    %167 = vperm.xlu0 %166, %v40
    %v168 = vpop.permute.xlu0 %167
    %170 = vset.pattern.permute.xlu0 1
    %171 = vperm.xlu0 %170, %v41
    %v172 = vpop.permute.xlu0 %171
    %174 = vset.pattern.permute.xlu0 1
    %175 = vperm.xlu0 %174, %v42
    %v176 = vpop.permute.xlu0 %175
    %178 = vset.pattern.permute.xlu0 1
    %179 = vperm.xlu0 %178, %v43
    %v180 = vpop.permute.xlu0 %179
    %182 = vset.pattern.permute.xlu0 1
    %183 = vperm.xlu0 %182, %v44
    %v184 = vpop.permute.xlu0 %183
    %186 = vset.pattern.permute.xlu0 1
    %187 = vperm.xlu0 %186, %v45
    %v188 = vpop.permute.xlu0 %187
    %190 = vset.pattern.permute.xlu0 1
    %191 = vperm.xlu0 %190, %v46
    %v192 = vpop.permute.xlu0 %191
    %194 = vset.pattern.permute.xlu0 1
    %195 = vperm.xlu0 %194, %v47
    %v196 = vpop.permute.xlu0 %195
    %198 = vset.pattern.permute.xlu0 1
    %199 = vperm.xlu0 %198, %v48
    %v200 = vpop.permute.xlu0 %199
    %202 = vset.pattern.permute.xlu0 1
    %203 = vperm.xlu0 %202, %v49
    %v204 = vpop.permute.xlu0 %203
    %206 = vset.pattern.permute.xlu0 1
    %207 = vperm.xlu0 %206, %v50
    %v208 = vpop.permute.xlu0 %207
    %210 = vset.pattern.permute.xlu0 1
    %211 = vperm.xlu0 %210, %v51
    %v212 = vpop.permute.xlu0 %211
    %214 = vset.pattern.permute.xlu0 1
    %215 = vperm.xlu0 %214, %v52
    %v216 = vpop.permute.xlu0 %215
    %218 = vset.pattern.permute.xlu0 1
    %219 = vperm.xlu0 %218, %v53
    %v220 = vpop.permute.xlu0 %219
    %222 = vset.pattern.permute.xlu0 1
    %223 = vperm.xlu0 %222, %v54
    %v224 = vpop.permute.xlu0 %223
    %v226 = vld [vmem:[%s1] sm:$0xff]
    %v227 = vld [vmem:[%s1 + $0x8] sm:$0xff]
    %v228 = vld [vmem:[%s1 + $0x10] sm:$0xff]
    %v229 = vld [vmem:[%s1 + $0x18] sm:$0xff]
    %v230 = vld [vmem:[%s1 + $0x20] sm:$0xff]
    %v231 = vld [vmem:[%s1 + $0x28] sm:$0xff]
    %v232 = vld [vmem:[%s1 + $0x30] sm:$0xff]
    %v233 = vld [vmem:[%s1 + $0x38] sm:$0xff]
    %v234 = vld [vmem:[%s1 + $0x40] sm:$0xff]
    %v235 = vld [vmem:[%s1 + $0x48] sm:$0xff]
    %v236 = vld [vmem:[%s1 + $0x50] sm:$0xff]
    %v237 = vld [vmem:[%s1 + $0x58] sm:$0xff]
    %v238 = vld [vmem:[%s1 + $0x60] sm:$0xff]
    %v239 = vld [vmem:[%s1 + $0x68] sm:$0xff]
    %v240 = vld [vmem:[%s1 + $0x70] sm:$0xff]
    %v241 = vld [vmem:[%s1 + $0x78] sm:$0xff]
    %v242 = vld [vmem:[%s1 + $0x80] sm:$0xff]
    %v243 = vld [vmem:[%s1 + $0x88] sm:$0xff]
    %v244 = vld [vmem:[%s1 + $0x90] sm:$0x7]
    %245 = vset.pattern.permute.xlu0 1
    %246 = vperm.xlu0 %245, %v226
    %v247 = vpop.permute.xlu0 %246
    %248 = vset.pattern.permute.xlu0 1
    %249 = vperm.xlu0 %248, %v227
    %v250 = vpop.permute.xlu0 %249
    %251 = vset.pattern.permute.xlu0 1
    %252 = vperm.xlu0 %251, %v228
    %v253 = vpop.permute.xlu0 %252
    %254 = vset.pattern.permute.xlu0 1
    %255 = vperm.xlu0 %254, %v229
    %v256 = vpop.permute.xlu0 %255
    %257 = vset.pattern.permute.xlu0 1
    %258 = vperm.xlu0 %257, %v230
    %v259 = vpop.permute.xlu0 %258
    %260 = vset.pattern.permute.xlu0 1
    %261 = vperm.xlu0 %260, %v231
    %v262 = vpop.permute.xlu0 %261
    %263 = vset.pattern.permute.xlu0 1
    %264 = vperm.xlu0 %263, %v232
    %v265 = vpop.permute.xlu0 %264
    %266 = vset.pattern.permute.xlu0 1
    %267 = vperm.xlu0 %266, %v233
    %v268 = vpop.permute.xlu0 %267
    %269 = vset.pattern.permute.xlu0 1
    %270 = vperm.xlu0 %269, %v234
    %v271 = vpop.permute.xlu0 %270
    %272 = vset.pattern.permute.xlu0 1
    %273 = vperm.xlu0 %272, %v235
    %v274 = vpop.permute.xlu0 %273
    %275 = vset.pattern.permute.xlu0 1
    %276 = vperm.xlu0 %275, %v236
    %v277 = vpop.permute.xlu0 %276
    %278 = vset.pattern.permute.xlu0 1
    %279 = vperm.xlu0 %278, %v237
    %v280 = vpop.permute.xlu0 %279
    %281 = vset.pattern.permute.xlu0 1
    %282 = vperm.xlu0 %281, %v238
    %v283 = vpop.permute.xlu0 %282
    %284 = vset.pattern.permute.xlu0 1
    %285 = vperm.xlu0 %284, %v239
    %v286 = vpop.permute.xlu0 %285
    %287 = vset.pattern.permute.xlu0 1
    %288 = vperm.xlu0 %287, %v240
    %v289 = vpop.permute.xlu0 %288
    %290 = vset.pattern.permute.xlu0 1
    %291 = vperm.xlu0 %290, %v241
    %v292 = vpop.permute.xlu0 %291
    %293 = vset.pattern.permute.xlu0 1
    %294 = vperm.xlu0 %293, %v242
    %v295 = vpop.permute.xlu0 %294
    %296 = vset.pattern.permute.xlu0 1
    %297 = vperm.xlu0 %296, %v243
    %v298 = vpop.permute.xlu0 %297
    %299 = vset.pattern.permute.xlu0 1
    %300 = vperm.xlu0 %299, %v244
    %v301 = vpop.permute.xlu0 %300
    %vm302 = vcmp.ge.s32.totalorder %v35, %v247
    %vm303 = vcmp.ge.s32.totalorder %v35, %v250
    %vm304 = vcmp.ge.s32.totalorder %v35, %v253
    %vm305 = vcmp.ge.s32.totalorder %v35, %v256
    %vm306 = vcmp.ge.s32.totalorder %v35, %v259
    %vm307 = vcmp.ge.s32.totalorder %v35, %v262
    %vm308 = vcmp.ge.s32.totalorder %v35, %v265
    %vm309 = vcmp.ge.s32.totalorder %v35, %v268
    %vm310 = vcmp.ge.s32.totalorder %v35, %v271
    %vm311 = vcmp.ge.s32.totalorder %v35, %v274
    %vm312 = vcmp.ge.s32.totalorder %v35, %v277
    %vm313 = vcmp.ge.s32.totalorder %v35, %v280
    %vm314 = vcmp.ge.s32.totalorder %v35, %v283
    %vm315 = vcmp.ge.s32.totalorder %v35, %v286
    %vm316 = vcmp.ge.s32.totalorder %v35, %v289
    %vm317 = vcmp.ge.s32.totalorder %v35, %v292
    %vm318 = vcmp.ge.s32.totalorder %v35, %v295
    %vm319 = vcmp.ge.s32.totalorder %v35, %v298
    %vm320 = vcmp.ge.s32.totalorder %v35, %v301
    %v321 = vsel %vm302, %v152, %v58
    %v322 = vsel %vm303, %v156, %v63
    %v323 = vsel %vm304, %v160, %v68
    %v324 = vsel %vm305, %v164, %v73
    %v325 = vsel %vm306, %v168, %v78
    %v326 = vsel %vm307, %v172, %v83
    %v327 = vsel %vm308, %v176, %v88
    %v328 = vsel %vm309, %v180, %v93
    %v329 = vsel %vm310, %v184, %v98
    %v330 = vsel %vm311, %v188, %v103
    %v331 = vsel %vm312, %v192, %v108
    %v332 = vsel %vm313, %v196, %v113
    %v333 = vsel %vm314, %v200, %v118
    %v334 = vsel %vm315, %v204, %v123
    %v335 = vsel %vm316, %v208, %v128
    %v336 = vsel %vm317, %v212, %v133
    %v337 = vsel %vm318, %v216, %v138
    %v338 = vsel %vm319, %v220, %v143
    %v339 = vsel %vm320, %v224, %v148
    %340 = vset.pattern.permute.xlu0 2
    %341 = vperm.xlu0 %340, %v36
    %v342 = vpop.permute.xlu0 %341
    %344 = vset.pattern.permute.xlu0 2
    %345 = vperm.xlu0 %344, %v37
    %v346 = vpop.permute.xlu0 %345
    %348 = vset.pattern.permute.xlu0 2
    %349 = vperm.xlu0 %348, %v38
    %v350 = vpop.permute.xlu0 %349
    %352 = vset.pattern.permute.xlu0 2
    %353 = vperm.xlu0 %352, %v39
    %v354 = vpop.permute.xlu0 %353
    %356 = vset.pattern.permute.xlu0 2
    %357 = vperm.xlu0 %356, %v40
    %v358 = vpop.permute.xlu0 %357
    %360 = vset.pattern.permute.xlu0 2
    %361 = vperm.xlu0 %360, %v41
    %v362 = vpop.permute.xlu0 %361
    %364 = vset.pattern.permute.xlu0 2
    %365 = vperm.xlu0 %364, %v42
    %v366 = vpop.permute.xlu0 %365
    %368 = vset.pattern.permute.xlu0 2
    %369 = vperm.xlu0 %368, %v43
    %v370 = vpop.permute.xlu0 %369
    %372 = vset.pattern.permute.xlu0 2
    %373 = vperm.xlu0 %372, %v44
    %v374 = vpop.permute.xlu0 %373
    %376 = vset.pattern.permute.xlu0 2
    %377 = vperm.xlu0 %376, %v45
    %v378 = vpop.permute.xlu0 %377
    %380 = vset.pattern.permute.xlu0 2
    %381 = vperm.xlu0 %380, %v46
    %v382 = vpop.permute.xlu0 %381
    %384 = vset.pattern.permute.xlu0 2
    %385 = vperm.xlu0 %384, %v47
    %v386 = vpop.permute.xlu0 %385
    %388 = vset.pattern.permute.xlu0 2
    %389 = vperm.xlu0 %388, %v48
    %v390 = vpop.permute.xlu0 %389
    %392 = vset.pattern.permute.xlu0 2
    %393 = vperm.xlu0 %392, %v49
    %v394 = vpop.permute.xlu0 %393
    %396 = vset.pattern.permute.xlu0 2
    %397 = vperm.xlu0 %396, %v50
    %v398 = vpop.permute.xlu0 %397
    %400 = vset.pattern.permute.xlu0 2
    %401 = vperm.xlu0 %400, %v51
    %v402 = vpop.permute.xlu0 %401
    %404 = vset.pattern.permute.xlu0 2
    %405 = vperm.xlu0 %404, %v52
    %v406 = vpop.permute.xlu0 %405
    %408 = vset.pattern.permute.xlu0 2
    %409 = vperm.xlu0 %408, %v53
    %v410 = vpop.permute.xlu0 %409
    %412 = vset.pattern.permute.xlu0 2
    %413 = vperm.xlu0 %412, %v54
    %v414 = vpop.permute.xlu0 %413
    %416 = vset.pattern.permute.xlu0 2
    %417 = vperm.xlu0 %416, %v226
    %v418 = vpop.permute.xlu0 %417
    %419 = vset.pattern.permute.xlu0 2
    %420 = vperm.xlu0 %419, %v227
    %v421 = vpop.permute.xlu0 %420
    %422 = vset.pattern.permute.xlu0 2
    %423 = vperm.xlu0 %422, %v228
    %v424 = vpop.permute.xlu0 %423
    %425 = vset.pattern.permute.xlu0 2
    %426 = vperm.xlu0 %425, %v229
    %v427 = vpop.permute.xlu0 %426
    %428 = vset.pattern.permute.xlu0 2
    %429 = vperm.xlu0 %428, %v230
    %v430 = vpop.permute.xlu0 %429
    %431 = vset.pattern.permute.xlu0 2
    %432 = vperm.xlu0 %431, %v231
    %v433 = vpop.permute.xlu0 %432
    %434 = vset.pattern.permute.xlu0 2
    %435 = vperm.xlu0 %434, %v232
    %v436 = vpop.permute.xlu0 %435
    %437 = vset.pattern.permute.xlu0 2
    %438 = vperm.xlu0 %437, %v233
    %v439 = vpop.permute.xlu0 %438
    %440 = vset.pattern.permute.xlu0 2
    %441 = vperm.xlu0 %440, %v234
    %v442 = vpop.permute.xlu0 %441
    %443 = vset.pattern.permute.xlu0 2
    %444 = vperm.xlu0 %443, %v235
    %v445 = vpop.permute.xlu0 %444
    %446 = vset.pattern.permute.xlu0 2
    %447 = vperm.xlu0 %446, %v236
    %v448 = vpop.permute.xlu0 %447
    %449 = vset.pattern.permute.xlu0 2
    %450 = vperm.xlu0 %449, %v237
    %v451 = vpop.permute.xlu0 %450
    %452 = vset.pattern.permute.xlu0 2
    %453 = vperm.xlu0 %452, %v238
    %v454 = vpop.permute.xlu0 %453
    %455 = vset.pattern.permute.xlu0 2
    %456 = vperm.xlu0 %455, %v239
    %v457 = vpop.permute.xlu0 %456
    %458 = vset.pattern.permute.xlu0 2
    %459 = vperm.xlu0 %458, %v240
    %v460 = vpop.permute.xlu0 %459
    %461 = vset.pattern.permute.xlu0 2
    %462 = vperm.xlu0 %461, %v241
    %v463 = vpop.permute.xlu0 %462
    %464 = vset.pattern.permute.xlu0 2
    %465 = vperm.xlu0 %464, %v242
    %v466 = vpop.permute.xlu0 %465
    %467 = vset.pattern.permute.xlu0 2
    %468 = vperm.xlu0 %467, %v243
    %v469 = vpop.permute.xlu0 %468
    %470 = vset.pattern.permute.xlu0 2
    %471 = vperm.xlu0 %470, %v244
    %v472 = vpop.permute.xlu0 %471
    %vm473 = vcmp.ge.s32.totalorder %v35, %v418
    %vm474 = vcmp.ge.s32.totalorder %v35, %v421
    %vm475 = vcmp.ge.s32.totalorder %v35, %v424
    %vm476 = vcmp.ge.s32.totalorder %v35, %v427
    %vm477 = vcmp.ge.s32.totalorder %v35, %v430
    %vm478 = vcmp.ge.s32.totalorder %v35, %v433
    %vm479 = vcmp.ge.s32.totalorder %v35, %v436
    %vm480 = vcmp.ge.s32.totalorder %v35, %v439
    %vm481 = vcmp.ge.s32.totalorder %v35, %v442
    %vm482 = vcmp.ge.s32.totalorder %v35, %v445
    %vm483 = vcmp.ge.s32.totalorder %v35, %v448
    %vm484 = vcmp.ge.s32.totalorder %v35, %v451
    %vm485 = vcmp.ge.s32.totalorder %v35, %v454
    %vm486 = vcmp.ge.s32.totalorder %v35, %v457
    %vm487 = vcmp.ge.s32.totalorder %v35, %v460
    %vm488 = vcmp.ge.s32.totalorder %v35, %v463
    %vm489 = vcmp.ge.s32.totalorder %v35, %v466
    %vm490 = vcmp.ge.s32.totalorder %v35, %v469
    %vm491 = vcmp.ge.s32.totalorder %v35, %v472
    %v492 = vsel %vm473, %v342, %v321
    %v493 = vsel %vm474, %v346, %v322
    %v494 = vsel %vm475, %v350, %v323
    %v495 = vsel %vm476, %v354, %v324
    %v496 = vsel %vm477, %v358, %v325
    %v497 = vsel %vm478, %v362, %v326
    %v498 = vsel %vm479, %v366, %v327
    %v499 = vsel %vm480, %v370, %v328
    %v500 = vsel %vm481, %v374, %v329
    %v501 = vsel %vm482, %v378, %v330
    %v502 = vsel %vm483, %v382, %v331
    %v503 = vsel %vm484, %v386, %v332
    %v504 = vsel %vm485, %v390, %v333
    %v505 = vsel %vm486, %v394, %v334
    %v506 = vsel %vm487, %v398, %v335
    %v507 = vsel %vm488, %v402, %v336
    %v508 = vsel %vm489, %v406, %v337
    %v509 = vsel %vm490, %v410, %v338
    %v510 = vsel %vm491, %v414, %v339
    %511 = vset.pattern.permute.xlu0 3
    %512 = vperm.xlu0 %511, %v36
    %v513 = vpop.permute.xlu0 %512
    %515 = vset.pattern.permute.xlu0 3
    %516 = vperm.xlu0 %515, %v37
    %v517 = vpop.permute.xlu0 %516
    %519 = vset.pattern.permute.xlu0 3
    %520 = vperm.xlu0 %519, %v38
    %v521 = vpop.permute.xlu0 %520
    %523 = vset.pattern.permute.xlu0 3
    %524 = vperm.xlu0 %523, %v39
    %v525 = vpop.permute.xlu0 %524
    %527 = vset.pattern.permute.xlu0 3
    %528 = vperm.xlu0 %527, %v40
    %v529 = vpop.permute.xlu0 %528
    %531 = vset.pattern.permute.xlu0 3
    %532 = vperm.xlu0 %531, %v41
    %v533 = vpop.permute.xlu0 %532
    %535 = vset.pattern.permute.xlu0 3
    %536 = vperm.xlu0 %535, %v42
    %v537 = vpop.permute.xlu0 %536
    %539 = vset.pattern.permute.xlu0 3
    %540 = vperm.xlu0 %539, %v43
    %v541 = vpop.permute.xlu0 %540
    %543 = vset.pattern.permute.xlu0 3
    %544 = vperm.xlu0 %543, %v44
    %v545 = vpop.permute.xlu0 %544
    %547 = vset.pattern.permute.xlu0 3
    %548 = vperm.xlu0 %547, %v45
    %v549 = vpop.permute.xlu0 %548
    %551 = vset.pattern.permute.xlu0 3
    %552 = vperm.xlu0 %551, %v46
    %v553 = vpop.permute.xlu0 %552
    %555 = vset.pattern.permute.xlu0 3
    %556 = vperm.xlu0 %555, %v47
    %v557 = vpop.permute.xlu0 %556
    %559 = vset.pattern.permute.xlu0 3
    %560 = vperm.xlu0 %559, %v48
    %v561 = vpop.permute.xlu0 %560
    %563 = vset.pattern.permute.xlu0 3
    %564 = vperm.xlu0 %563, %v49
    %v565 = vpop.permute.xlu0 %564
    %567 = vset.pattern.permute.xlu0 3
    %568 = vperm.xlu0 %567, %v50
    %v569 = vpop.permute.xlu0 %568
    %571 = vset.pattern.permute.xlu0 3
    %572 = vperm.xlu0 %571, %v51
    %v573 = vpop.permute.xlu0 %572
    %575 = vset.pattern.permute.xlu0 3
    %576 = vperm.xlu0 %575, %v52
    %v577 = vpop.permute.xlu0 %576
    %579 = vset.pattern.permute.xlu0 3
    %580 = vperm.xlu0 %579, %v53
    %v581 = vpop.permute.xlu0 %580
    %583 = vset.pattern.permute.xlu0 3
    %584 = vperm.xlu0 %583, %v54
    %v585 = vpop.permute.xlu0 %584
    %587 = vset.pattern.permute.xlu0 3
    %588 = vperm.xlu0 %587, %v226
    %v589 = vpop.permute.xlu0 %588
    %590 = vset.pattern.permute.xlu0 3
    %591 = vperm.xlu0 %590, %v227
    %v592 = vpop.permute.xlu0 %591
    %593 = vset.pattern.permute.xlu0 3
    %594 = vperm.xlu0 %593, %v228
    %v595 = vpop.permute.xlu0 %594
    %596 = vset.pattern.permute.xlu0 3
    %597 = vperm.xlu0 %596, %v229
    %v598 = vpop.permute.xlu0 %597
    %599 = vset.pattern.permute.xlu0 3
    %600 = vperm.xlu0 %599, %v230
    %v601 = vpop.permute.xlu0 %600
    %602 = vset.pattern.permute.xlu0 3
    %603 = vperm.xlu0 %602, %v231
    %v604 = vpop.permute.xlu0 %603
    %605 = vset.pattern.permute.xlu0 3
    %606 = vperm.xlu0 %605, %v232
    %v607 = vpop.permute.xlu0 %606
    %608 = vset.pattern.permute.xlu0 3
    %609 = vperm.xlu0 %608, %v233
    %v610 = vpop.permute.xlu0 %609
    %611 = vset.pattern.permute.xlu0 3
    %612 = vperm.xlu0 %611, %v234
    %v613 = vpop.permute.xlu0 %612
    %614 = vset.pattern.permute.xlu0 3
    %615 = vperm.xlu0 %614, %v235
    %v616 = vpop.permute.xlu0 %615
    %617 = vset.pattern.permute.xlu0 3
    %618 = vperm.xlu0 %617, %v236
    %v619 = vpop.permute.xlu0 %618
    %620 = vset.pattern.permute.xlu0 3
    %621 = vperm.xlu0 %620, %v237
    %v622 = vpop.permute.xlu0 %621
    %623 = vset.pattern.permute.xlu0 3
    %624 = vperm.xlu0 %623, %v238
    %v625 = vpop.permute.xlu0 %624
    %626 = vset.pattern.permute.xlu0 3
    %627 = vperm.xlu0 %626, %v239
    %v628 = vpop.permute.xlu0 %627
    %629 = vset.pattern.permute.xlu0 3
    %630 = vperm.xlu0 %629, %v240
    %v631 = vpop.permute.xlu0 %630
    %632 = vset.pattern.permute.xlu0 3
    %633 = vperm.xlu0 %632, %v241
    %v634 = vpop.permute.xlu0 %633
    %635 = vset.pattern.permute.xlu0 3
    %636 = vperm.xlu0 %635, %v242
    %v637 = vpop.permute.xlu0 %636
    %638 = vset.pattern.permute.xlu0 3
    %639 = vperm.xlu0 %638, %v243
    %v640 = vpop.permute.xlu0 %639
    %641 = vset.pattern.permute.xlu0 3
    %642 = vperm.xlu0 %641, %v244
    %v643 = vpop.permute.xlu0 %642
    %vm644 = vcmp.ge.s32.totalorder %v35, %v589
    %vm645 = vcmp.ge.s32.totalorder %v35, %v592
    %vm646 = vcmp.ge.s32.totalorder %v35, %v595
    %vm647 = vcmp.ge.s32.totalorder %v35, %v598
    %vm648 = vcmp.ge.s32.totalorder %v35, %v601
    %vm649 = vcmp.ge.s32.totalorder %v35, %v604
    %vm650 = vcmp.ge.s32.totalorder %v35, %v607
    %vm651 = vcmp.ge.s32.totalorder %v35, %v610
    %vm652 = vcmp.ge.s32.totalorder %v35, %v613
    %vm653 = vcmp.ge.s32.totalorder %v35, %v616
    %vm654 = vcmp.ge.s32.totalorder %v35, %v619
    %vm655 = vcmp.ge.s32.totalorder %v35, %v622
    %vm656 = vcmp.ge.s32.totalorder %v35, %v625
    %vm657 = vcmp.ge.s32.totalorder %v35, %v628
    %vm658 = vcmp.ge.s32.totalorder %v35, %v631
    %vm659 = vcmp.ge.s32.totalorder %v35, %v634
    %vm660 = vcmp.ge.s32.totalorder %v35, %v637
    %vm661 = vcmp.ge.s32.totalorder %v35, %v640
    %vm662 = vcmp.ge.s32.totalorder %v35, %v643
    %v663 = vsel %vm644, %v513, %v492
    %v664 = vsel %vm645, %v517, %v493
    %v665 = vsel %vm646, %v521, %v494
    %v666 = vsel %vm647, %v525, %v495
    %v667 = vsel %vm648, %v529, %v496
    %v668 = vsel %vm649, %v533, %v497
    %v669 = vsel %vm650, %v537, %v498
    %v670 = vsel %vm651, %v541, %v499
    %v671 = vsel %vm652, %v545, %v500
    %v672 = vsel %vm653, %v549, %v501
    %v673 = vsel %vm654, %v553, %v502
    %v674 = vsel %vm655, %v557, %v503
    %v675 = vsel %vm656, %v561, %v504
    %v676 = vsel %vm657, %v565, %v505
    %v677 = vsel %vm658, %v569, %v506
    %v678 = vsel %vm659, %v573, %v507
    %v679 = vsel %vm660, %v577, %v508
    %v680 = vsel %vm661, %v581, %v509
    %v681 = vsel %vm662, %v585, %v510
    %v682 = vmul.f32 %v15, %v663
    %v683 = vmul.f32 %v16, %v664
    %v684 = vmul.f32 %v17, %v665
    %v685 = vmul.f32 %v18, %v666
    %v686 = vmul.f32 %v19, %v667
    %v687 = vmul.f32 %v20, %v668
    %v688 = vmul.f32 %v21, %v669
    %v689 = vmul.f32 %v22, %v670
    %v690 = vmul.f32 %v23, %v671
    %v691 = vmul.f32 %v24, %v672
    %v692 = vmul.f32 %v25, %v673
    %v693 = vmul.f32 %v26, %v674
    %v694 = vmul.f32 %v27, %v675
    %v695 = vmul.f32 %v28, %v676
    %v696 = vmul.f32 %v29, %v677
    %v697 = vmul.f32 %v30, %v678
    %v698 = vmul.f32 %v31, %v679
    %v699 = vmul.f32 %v32, %v680
    %v700 = vmul.f32 %v33, %v681
    %701 = vst [vmem:[#allocation2] sm:$0xff] %v682
    %702 = vst [vmem:[#allocation2 + $0x8] sm:$0xff] %v683
    %703 = vst [vmem:[#allocation2 + $0x10] sm:$0xff] %v684
    %704 = vst [vmem:[#allocation2 + $0x18] sm:$0xff] %v685
    %705 = vst [vmem:[#allocation2 + $0x20] sm:$0xff] %v686
    %706 = vst [vmem:[#allocation2 + $0x28] sm:$0xff] %v687
    %707 = vst [vmem:[#allocation2 + $0x30] sm:$0xff] %v688
    %708 = vst [vmem:[#allocation2 + $0x38] sm:$0xff] %v689
    %709 = vst [vmem:[#allocation2 + $0x40] sm:$0xff] %v690
    %710 = vst [vmem:[#allocation2 + $0x48] sm:$0xff] %v691
    %711 = vst [vmem:[#allocation2 + $0x50] sm:$0xff] %v692
    %712 = vst [vmem:[#allocation2 + $0x58] sm:$0xff] %v693
    %713 = vst [vmem:[#allocation2 + $0x60] sm:$0xff] %v694
    %714 = vst [vmem:[#allocation2 + $0x68] sm:$0xff] %v695
    %715 = vst [vmem:[#allocation2 + $0x70] sm:$0xff] %v696
    %716 = vst [vmem:[#allocation2 + $0x78] sm:$0xff] %v697
    %717 = vst [vmem:[#allocation2 + $0x80] sm:$0xff] %v698
    %718 = vst [vmem:[#allocation2 + $0x88] sm:$0xff] %v699
    %719 = vst [vmem:[#allocation2 + $0x90] sm:$0x7] %v700
    // Predicated region
    $region14: #{tpu_custom_call.1} parent=1 // pred_check
      _
    $region15: #{tpu_custom_call.1} parent=1 // pred_check_branch
      %721 = sbr.rel (0) target = $region17
    $region16: #{tpu_custom_call.1} parent=1 // pred_region
      %s723 = ssub.s32 2432, 2432
      %724 = vsyncadd [#allocation3], %s723
      %s725 = sshll.u32 [#allocation2], 4
      %s726 = int_to_ptr.vmem [resolvable:$true] %s725
      %731 = dma.vmem_to_hbm [thread:$0]  %s726, 2432, %s3, [#allocation3], 128, 128, 8
    $region17: #{tpu_custom_call.1} parent=1 // pred_fallthru
      _
    // Predicated region
    $region18: #{tpu_custom_call.1} parent=1 // pred_check
      _
    $region19: #{tpu_custom_call.1} parent=1 // pred_check_branch
      %733 = sbr.rel (0) target = $region21
    $region20: #{tpu_custom_call.1} parent=1 // pred_region
      %734 = dma.done [#allocation3], 2432
    $region21: #{tpu_custom_call.1} parent=1 // pred_fallthru
      _
    %735 = vsyncpa [#allocation3], 1

</llo_original>
